<compile_context>
chip_gen: v5e
topology: v5e:2x2
jax: 0.10.0
libtpu: 0.0.40
codegen_flags: <defaults>
</compile_context>

<pallas_src>
import functools

import jax
import jax.numpy as jnp
from jax.experimental import pallas as pl
from jax.experimental.pallas import tpu as pltpu


def _mtl_kernel(lv_ref, pred_ref, targ_ref, out_ref, acc_ref, *,
                batch, tb, masked):
    """One grid step handles a (num_task, tb) slice of predictions/targets."""
    k = pl.program_id(0)

    @pl.when(k == 0)
    def _init():
        acc_ref[...] = jnp.zeros_like(acc_ref)

    lv = lv_ref[...]                  # (num_task, 1) f32, resident every step
    w = jnp.exp(-lv)                  # per-task weight exp(-log_var), EUP work

    p = pred_ref[...]                 # (num_task, tb) f32 probabilities
    t = targ_ref[...]                 # (num_task, tb) f32 binary labels

    # Elementwise binary cross entropy, matching torch exactly:
    #   -(log(p) * t + log(1 - p) * (1 - t))
    loss = -(jnp.log(p) * t + jnp.log(1.0 - p) * (1.0 - t))

    if masked:
        # Zero out padded batch columns (padding values are finite by design).
        col = k * tb + jax.lax.broadcasted_iota(jnp.int32, loss.shape, 1)
        loss = jnp.where(col < batch, loss, 0.0)

    # Weight per task, reduce to a scalar partial sum, accumulate.
    part = jnp.sum(loss * w, axis=1, keepdims=True)          # (num_task, 1)
    acc_ref[...] += jnp.sum(part, axis=0, keepdims=True)      # (1, 1)

    @pl.when(k == pl.num_programs(0) - 1)
    def _finalize():
        # The "+ log_vars[i]" terms are added exactly once, at the end.
        out_ref[...] = acc_ref[...] + jnp.sum(lv, axis=0, keepdims=True)


def multitask_loss(y_pred, targets, log_vars):
    """
    y_pred:   (num_task, batch) f32, probabilities in (0, 1)   (y_pred[i] per task)
    targets:  (batch, num_task) f32, binary labels             (targets[:, i] per task)
    log_vars: (num_task,) f32, learned log-variances
    returns:  scalar f32 loss (same value as the PyTorch forward)
    """
    num_task, batch = y_pred.shape
    assert targets.shape == (batch, num_task)
    assert log_vars.shape == (num_task,)

    LANE = 128
    b_pad = max(LANE, ((batch + LANE - 1) // LANE) * LANE)
    # Largest multiple-of-128 batch tile (<= 2048) that divides the padded batch.
    tb = LANE
    for cand in (2048, 1024, 512, 256, 128):
        if b_pad % cand == 0:
            tb = cand
            break
    grid = (b_pad // tb,)
    masked = (b_pad != batch)

    # Task-major, batch-minor layout: lane axis = batch (lane-dense tiles).
    p = y_pred.astype(jnp.float32)
    t = jnp.transpose(targets.astype(jnp.float32), (1, 0))     # (num_task, batch)
    if masked:
        # Pad with finite-loss values; kernel masks them out before reducing.
        p = jnp.pad(p, ((0, 0), (0, b_pad - batch)), constant_values=0.5)
        t = jnp.pad(t, ((0, 0), (0, b_pad - batch)), constant_values=0.0)
    lv = log_vars.astype(jnp.float32).reshape(num_task, 1)

    kernel = functools.partial(_mtl_kernel, batch=batch, tb=tb, masked=masked)
    out = pl.pallas_call(
        kernel,
        out_shape=jax.ShapeDtypeStruct((1, 1), jnp.float32),
        grid_spec=pltpu.PrefetchScalarGridSpec(
            num_scalar_prefetch=0,
            grid=grid,
            in_specs=[
                pl.BlockSpec((num_task, 1), lambda k: (0, 0)),   # log_vars (resident)
                pl.BlockSpec((num_task, tb), lambda k: (0, k)),  # y_pred tile
                pl.BlockSpec((num_task, tb), lambda k: (0, k)),  # targets^T tile
            ],
            out_specs=pl.BlockSpec((1, 1), lambda k: (0, 0)),    # scalar accumulator out
            scratch_shapes=[pltpu.VMEM((1, 1), jnp.float32)],
        ),
        compiler_params=pltpu.CompilerParams(
            # Grid axis carries the running sum -> it is a reduction axis.
            dimension_semantics=("arbitrary",),
        ),
    )(lv, p, t)
    return out[0, 0]


def multitask_loss_ref(y_pred, targets, log_vars):
    """Pure-JAX transcription of the PyTorch forward (correctness reference)."""
    total = jnp.float32(0.0)
    for i in range(log_vars.shape[0]):
        x = y_pred[i].astype(jnp.float32)
        y = targets[:, i].astype(jnp.float32)
        bce = jnp.sum(-(jnp.log(x) * y + jnp.log(1.0 - x) * (1.0 - y)))
        total = total + jnp.exp(-log_vars[i]) * bce + log_vars[i]
    return total


if __name__ == "__main__":
    num_task, batch = 4, 8

    key = jax.random.PRNGKey(0)
    kp, kt, kv = jax.random.split(key, 3)

    # y_pred[i] is a vector of per-sample probabilities for task i.
    y_pred = jax.random.uniform(kp, (num_task, batch), jnp.float32, 0.05, 0.95)
    targets = jax.random.bernoulli(kt, 0.5, (batch, num_task)).astype(jnp.float32)
    # log_vars is a learned nn.Parameter (init 0); use small nonzero values so
    # the exp(-log_var) weighting and the +log_var terms are actually exercised.
    log_vars = 0.1 * jax.random.normal(kv, (num_task,), jnp.float32)

    loss = multitask_loss(y_pred, targets, log_vars)
    loss = jax.block_until_ready(loss)

    ref = multitask_loss_ref(y_pred, targets, log_vars)
    assert loss.shape == ()
    assert bool(jnp.isfinite(loss))
    assert jnp.allclose(loss, ref, atol=1e-3, rtol=1e-5), (loss, ref)

    print("KERNEL_OK")
</pallas_src>

<mosaic_0001>
module attributes {stable_mosaic.version = 11 : i64} {
  func.func @_mtl_kernel(%arg0: i32, %arg1: memref<4x1xf32, #tpu.memory_space<vmem>>, %arg2: memref<4x128xf32, #tpu.memory_space<vmem>>, %arg3: memref<4x128xf32, #tpu.memory_space<vmem>>, %arg4: memref<1x1xf32, #tpu.memory_space<vmem>>, %arg5: memref<1x1xf32, #tpu.memory_space<vmem>>) attributes {dimension_semantics = [#tpu.dimension_semantics<arbitrary>], iteration_bounds = array<i64: 1>, scalar_prefetch = 0 : i64, scratch_operands = 1 : i64, tpu.core_type = #tpu.core_type<tc>, window_params = [{pipeline_mode = #tpu.pipeline_mode<synchronous>, transform_indices = @transform_0, window_bounds = array<i64: 4, 1>}, {transform_indices = @transform_1, window_bounds = array<i64: 4, 128>}, {transform_indices = @transform_2, window_bounds = array<i64: 4, 128>}, {pipeline_mode = #tpu.pipeline_mode<synchronous>, transform_indices = @transform_3, window_bounds = array<i64: 1, 1>}]} {
    %c0_i32 = arith.constant 0 : i32
    %0 = arith.cmpi eq, %arg0, %c0_i32 : i32
    %1 = arith.extui %0 : i1 to i32
    %c0_i32_0 = arith.constant 0 : i32
    %2 = arith.cmpi ne, %1, %c0_i32_0 : i32
    scf.if %2 {
      %cst_18 = arith.constant 0.000000e+00 : f32
      %40 = vector.broadcast %cst_18 : f32 to vector<1x1xf32>
      %c0_19 = arith.constant 0 : index
      %c0_20 = arith.constant 0 : index
      %41 = vector.load %arg5[%c0_19, %c0_20] : memref<1x1xf32, #tpu.memory_space<vmem>>, vector<1x1xf32>
      tpu.vector_store %arg5[%c0_19, %c0_20], %40 {strides = array<i32>} : memref<1x1xf32, #tpu.memory_space<vmem>>, vector<1x1xf32>,
    } else {
    }
    %c0 = arith.constant 0 : index
    %c0_1 = arith.constant 0 : index
    %3 = vector.load %arg1[%c0, %c0_1] : memref<4x1xf32, #tpu.memory_space<vmem>>, vector<4x1xf32>
    %cst = arith.constant 0.000000e+00 : f32
    %4 = vector.broadcast %cst : f32 to vector<4x1xf32>
    %5 = arith.subf %4, %3 : vector<4x1xf32>
    %6 = math.exp %5 : vector<4x1xf32>
    %c0_2 = arith.constant 0 : index
    %c0_3 = arith.constant 0 : index
    %7 = vector.load %arg2[%c0_2, %c0_3] : memref<4x128xf32, #tpu.memory_space<vmem>>, vector<4x128xf32>
    %c0_4 = arith.constant 0 : index
    %c0_5 = arith.constant 0 : index
    %8 = vector.load %arg3[%c0_4, %c0_5] : memref<4x128xf32, #tpu.memory_space<vmem>>, vector<4x128xf32>
    %9 = math.log %7 : vector<4x128xf32>
    %10 = arith.mulf %9, %8 : vector<4x128xf32>
    %cst_6 = arith.constant 1.000000e+00 : f32
    %11 = vector.broadcast %cst_6 : f32 to vector<4x128xf32>
    %12 = arith.subf %11, %7 : vector<4x128xf32>
    %13 = math.log %12 : vector<4x128xf32>
    %cst_7 = arith.constant 1.000000e+00 : f32
    %14 = vector.broadcast %cst_7 : f32 to vector<4x128xf32>
    %15 = arith.subf %14, %8 : vector<4x128xf32>
    %16 = arith.mulf %13, %15 : vector<4x128xf32>
    %17 = arith.addf %10, %16 : vector<4x128xf32>
    %cst_8 = arith.constant 0.000000e+00 : f32
    %18 = vector.broadcast %cst_8 : f32 to vector<4x128xf32>
    %19 = arith.subf %18, %17 : vector<4x128xf32>
    %c128_i32 = arith.constant 128 : i32
    %20 = arith.muli %arg0, %c128_i32 : i32
    %21 = tpu.iota {dimensions = array<i32: 1>} : vector<4x128xi32>
    %22 = vector.broadcast %20 : i32 to vector<4x128xi32>
    %23 = arith.addi %22, %21 : vector<4x128xi32>
    %c8_i32 = arith.constant 8 : i32
    %24 = vector.broadcast %c8_i32 : i32 to vector<4x128xi32>
    %25 = arith.cmpi slt, %23, %24 : vector<4x128xi32>
    %cst_9 = arith.constant 0.000000e+00 : f32
    %26 = vector.broadcast %cst_9 : f32 to vector<4x128xf32>
    %27 = arith.select %25, %19, %26 : vector<4x128xi1>, vector<4x128xf32>
    %28 = vector.broadcast %6 : vector<4x1xf32> to vector<4x128xf32>
    %29 = arith.mulf %27, %28 : vector<4x128xf32>
    %cst_10 = arith.constant dense<0.000000e+00> : vector<4xf32>
    %30 = vector.multi_reduction <add>, %29, %cst_10 [1] : vector<4x128xf32> to vector<4xf32>
    %31 = vector.shape_cast %30 : vector<4xf32> to vector<4x1xf32>
    %c0_11 = arith.constant 0 : index
    %c0_12 = arith.constant 0 : index
    %32 = vector.load %arg5[%c0_11, %c0_12] : memref<1x1xf32, #tpu.memory_space<vmem>>, vector<1x1xf32>
    %cst_13 = arith.constant dense<0.000000e+00> : vector<1xf32>
    %33 = vector.multi_reduction <add>, %31, %cst_13 [0] : vector<4x1xf32> to vector<1xf32>
    %34 = vector.shape_cast %33 : vector<1xf32> to vector<1x1xf32>
    %35 = arith.addf %32, %34 : vector<1x1xf32>
    %c0_14 = arith.constant 0 : index
    %c0_15 = arith.constant 0 : index
    %36 = vector.load %arg5[%c0_14, %c0_15] : memref<1x1xf32, #tpu.memory_space<vmem>>, vector<1x1xf32>
    tpu.vector_store %arg5[%c0_14, %c0_15], %35 {strides = array<i32>} : memref<1x1xf32, #tpu.memory_space<vmem>>, vector<1x1xf32>,
    %c0_i32_16 = arith.constant 0 : i32
    %37 = arith.cmpi eq, %arg0, %c0_i32_16 : i32
    %38 = arith.extui %37 : i1 to i32
    %c0_i32_17 = arith.constant 0 : i32
    %39 = arith.cmpi ne, %38, %c0_i32_17 : i32
    scf.if %39 {
      %c0_18 = arith.constant 0 : index
      %c0_19 = arith.constant 0 : index
      %40 = vector.load %arg5[%c0_18, %c0_19] : memref<1x1xf32, #tpu.memory_space<vmem>>, vector<1x1xf32>
      %cst_20 = arith.constant dense<0.000000e+00> : vector<1xf32>
      %41 = vector.multi_reduction <add>, %3, %cst_20 [0] : vector<4x1xf32> to vector<1xf32>
      %42 = vector.shape_cast %41 : vector<1xf32> to vector<1x1xf32>
      %43 = arith.addf %40, %42 : vector<1x1xf32>
      %c0_21 = arith.constant 0 : index
      %c0_22 = arith.constant 0 : index
      %44 = vector.load %arg4[%c0_21, %c0_22] : memref<1x1xf32, #tpu.memory_space<vmem>>, vector<1x1xf32>
      tpu.vector_store %arg4[%c0_21, %c0_22], %43 {strides = array<i32>} : memref<1x1xf32, #tpu.memory_space<vmem>>, vector<1x1xf32>,
    } else {
    }
    return
  }
  func.func @transform_0(%arg0: i32) -> (i32, i32) {
    %c0_i32 = arith.constant 0 : i32
    %c0_i32_0 = arith.constant 0 : i32
    %c0_i32_1 = arith.constant 0 : i32
    return %c0_i32, %c0_i32_0 : i32, i32
  }
  func.func @transform_1(%arg0: i32) -> (i32, i32) {
    %c0_i32 = arith.constant 0 : i32
    %c0_i32_0 = arith.constant 0 : i32
    return %c0_i32, %arg0 : i32, i32
  }
  func.func @transform_2(%arg0: i32) -> (i32, i32) {
    %c0_i32 = arith.constant 0 : i32
    %c0_i32_0 = arith.constant 0 : i32
    return %c0_i32, %arg0 : i32, i32
  }
  func.func @transform_3(%arg0: i32) -> (i32, i32) {
    %c0_i32 = arith.constant 0 : i32
    %c0_i32_0 = arith.constant 0 : i32
    %c0_i32_1 = arith.constant 0 : i32
    return %c0_i32, %c0_i32_0 : i32, i32
  }
}

</mosaic_0001>

<llo_original>
// kernel: tpu_custom_call.1
$region0: #{tpu_custom_call.1}
  #allocation0 [shape = 'u32[]', space=smem, size = 0x4, offset = 0x4, fixed_abs, tag = 'smem constant byte address 0x4 - core index']
  #allocation1 [shape = 'u32[72,128]{1,0:T(1,128)}', space=vmem, size = 0x9000, scoped, tag = 'internal scratch']
  #allocation2 [shape = 'f32[1,1]{1,0:T(1,128)}', space=vmem, size = 0x200, scoped, tag = 'scratch operand']
  %s0 = inlined_call_operand.vmem [shape: f32[4,1], index: 0, kind: input, shape index: {}]
  %s1 = inlined_call_operand.vmem [shape: f32[4,128], index: 1, kind: input, shape index: {}]
  %s2 = inlined_call_operand.hbm [shape: f32[4,128], index: 2, kind: input, shape index: {}]
  %s3 = inlined_call_operand.hbm [shape: f32[1,1], index: 3, kind: output, shape index: {}]
  %s4 = sld [smem:[#allocation0]]
  $region34: #{tpu_custom_call.1} parent=0
    _
  %s6 = ssub.s32 1, %s4
  %s7 = scalar_select 0, %s6, %s4
  $region1: #{tpu_custom_call.1} parent=0
    #allocation3 [shape = 'u8[2048]{0}', space=vmem, size = 0x800, scoped, tag = 'input window, operand 2, single buffered']
    #allocation4 [shape = 's32[1]{0}', space=sflag, size = 0x4, scoped, tag = 'scoped memory for tpu_custom_call.1']
    #allocation5 [shape = 's32[1]{0}', space=sflag, size = 0x4, scoped, tag = 'scoped memory for tpu_custom_call.1']
    #allocation6 [shape = 'u8[512]{0}', space=vmem, size = 0x400, scoped, tag = 'output window, operand 0, single buffered']
    %8 = vsyncpa [#allocation4], 0
    %9 = vsyncpa [#allocation5], 0
    // Predicated region
    $region2: #{tpu_custom_call.1} parent=1 // pred_check
      _
    $region3: #{tpu_custom_call.1} parent=1 // pred_check_branch
      %11 = sbr.rel (0) target = $region5
    $region4: #{tpu_custom_call.1} parent=1 // pred_region
      _
    $region5: #{tpu_custom_call.1} parent=1 // pred_fallthru
      _
    // Predicated region
    $region6: #{tpu_custom_call.1} parent=1 // pred_check
      _
    $region7: #{tpu_custom_call.1} parent=1 // pred_check_branch
      %13 = sbr.rel (0) target = $region9
    $region8: #{tpu_custom_call.1} parent=1 // pred_region
      _
    $region9: #{tpu_custom_call.1} parent=1 // pred_fallthru
      _
    // Predicated region
    $region10: #{tpu_custom_call.1} parent=1 // pred_check
      _
    $region11: #{tpu_custom_call.1} parent=1 // pred_check_branch
      %15 = sbr.rel (0) target = $region13
    $region12: #{tpu_custom_call.1} parent=1 // pred_region
      %17 = vsyncadd [#allocation4], 0
      %s19 = sshll.u32 %s2, 4
      %s20 = int_to_ptr.hbm [resolvable:$true] %s19
      %s21 = sshll.u32 [#allocation3], 4
      %s22 = int_to_ptr.vmem [resolvable:$true] %s21
      %24 = dma.hbm_to_vmem [thread:$0]  %s20, 64, %s22, [#allocation4]
    $region13: #{tpu_custom_call.1} parent=1 // pred_fallthru
      _
    // Predicated region
    $region14: #{tpu_custom_call.1} parent=1 // pred_check
      _
    $region15: #{tpu_custom_call.1} parent=1 // pred_check_branch
      %26 = sbr.rel (0) target = $region17
    $region16: #{tpu_custom_call.1} parent=1 // pred_region
      %28 = dma.done [#allocation4], 64
    $region17: #{tpu_custom_call.1} parent=1 // pred_fallthru
      _
    %p29 = scmp.eq.s32.totalorder 0, 0
    // Predicated region
    $region18: #{tpu_custom_call.1} parent=1 // pred_check
      %p30 = pneg %p29
    $region19: #{tpu_custom_call.1} parent=1 // pred_check_branch
      %32 = sbr.rel (%p30) target = $region21
    $region20: #{tpu_custom_call.1} parent=1 // pred_region
      %vm33 = vcmask 0
      %34 = vst.msk [vmem:[#allocation2] sm:$0x1] %vm33, 0.0
    $region21: #{tpu_custom_call.1} parent=1 // pred_fallthru
      _
    %v35 = vld [vmem:[%s0] sm:$0xf]
    %v36 = vsub.f32 0.0, %v35
    %v37 = vmul.f32 %v36, 1.442695
    %v38 = vpow.pop %v37
    %v39 = vld [vmem:[%s1] sm:$0xf]
    %v40 = vld [vmem:[#allocation3] sm:$0xf]
    %v41 = vlog2.pop %v39
    %v42 = vmul.f32 %v41, 0.6931472
    %v43 = vmul.f32 %v42, %v40
    %v44 = vsub.f32 1.0, %v39
    %v45 = vlog2.pop %v44
    %v46 = vmul.f32 %v45, 0.6931472
    %v47 = vsub.f32 1.0, %v40
    %v48 = vmul.f32 %v46, %v47
    %v49 = vadd.f32 %v43, %v48
    %v50 = vsub.f32 0.0, %v49
    %s51 = smul.u32 0, 128
    %v52 = vlaneseq
    %v53 = vand.u32 %v52, 127
    %v54 = vstv %s51
    %v55 = vadd.s32 %v54, %v53
    %vm56 = vcmp.lt.s32.totalorder %v55, 8
    %v57 = vsel %vm56, %v50, 0.0
    %59 = vset.pattern.permute.xlu0 0
    %60 = vperm.xlu0 %59, %v38
    %v61 = vpop.permute.xlu0 %60
    %v63 = vmul.f32 %v57, %v61
    %vm64 = vcmask 1043456
    %v65 = vsel %vm64, %v63, 0.0
    %66 = vadd.xlane.f32.xlu0 %v65
    %v67 = vpop.xlane.xlu0 %66
    %v68 = vld [vmem:[#allocation2] sm:$0x1]
    %v69 = vsel %vm64, %v67, 0.0
    %v70 = vrot.slane %v69, 4
    %v71 = vadd.f32 %v69, %v70
    %v72 = vrot.slane %v71, 2
    %v73 = vadd.f32 %v71, %v72
    %v74 = vrot.slane %v73, 1
    %v75 = vadd.f32 %v73, %v74
    %v76 = vadd.f32 %v68, %v75
    %vm77 = vcmask 0
    %78 = vst.msk [vmem:[#allocation2] sm:$0x1] %vm77, %v76
    // Predicated region
    $region22: #{tpu_custom_call.1} parent=1 // pred_check
      %p79 = pneg %p29
    $region23: #{tpu_custom_call.1} parent=1 // pred_check_branch
      %81 = sbr.rel (%p79) target = $region25
    $region24: #{tpu_custom_call.1} parent=1 // pred_region
      %v82 = vld [vmem:[#allocation2] sm:$0x1]
      %vm83 = vcmask 3072
      %v84 = vsel %vm83, %v35, 0.0
      %v85 = vrot.slane %v84, 4
      %v86 = vadd.f32 %v84, %v85
      %v87 = vrot.slane %v86, 2
      %v88 = vadd.f32 %v86, %v87
      %v89 = vrot.slane %v88, 1
      %v90 = vadd.f32 %v88, %v89
      %v91 = vadd.f32 %v82, %v90
      %92 = vst.msk [vmem:[#allocation6] sm:$0x1] %vm77, %v91
    $region25: #{tpu_custom_call.1} parent=1 // pred_fallthru
      _
    // Predicated region
    $region26: #{tpu_custom_call.1} parent=1 // pred_check
      _
    $region27: #{tpu_custom_call.1} parent=1 // pred_check_branch
      %94 = sbr.rel (0) target = $region29
    $region28: #{tpu_custom_call.1} parent=1 // pred_region
      %96 = vsyncadd [#allocation5], 0
      %s98 = sshll.u32 [#allocation6], 4
      %s99 = int_to_ptr.vmem [resolvable:$true] %s98
      %s100 = sshll.u32 %s3, 4
      %s101 = int_to_ptr.hbm [resolvable:$true] %s100
      %103 = dma.vmem_to_hbm [thread:$0]  %s99, 16, %s101, [#allocation5]
    $region29: #{tpu_custom_call.1} parent=1 // pred_fallthru
      _
    // Predicated region
    $region30: #{tpu_custom_call.1} parent=1 // pred_check
      _
    $region31: #{tpu_custom_call.1} parent=1 // pred_check_branch
      %105 = sbr.rel (0) target = $region33
    $region32: #{tpu_custom_call.1} parent=1 // pred_region
      %107 = dma.done [#allocation5], 16
    $region33: #{tpu_custom_call.1} parent=1 // pred_fallthru
      _
    %108 = vsyncpa [#allocation4], 1
    %109 = vsyncpa [#allocation5], 1

</llo_original>
